<compile_context>
chip_gen: v7x
topology: tpu7x:2x2x1
jax: 0.10.0
libtpu: 0.0.40
codegen_flags: <defaults>
</compile_context>

<pallas_src>
import functools
import math

import jax
import jax.numpy as jnp
from jax import lax
from jax.experimental import pallas as pl
from jax.experimental.pallas import tpu as pltpu

LANES = 128            # vreg lane width
MAX_BLOCK_ROWS = 4096  # (4096, 128) f32 tile = 2 MiB per pipeline buffer
SUB_ROWS = 256         # strip-mine width inside a block (rows)
NUM_STATS = 6          # h0, h1, h_rest, S0, S1, S_valid


def _fused_kernel(x_ref, t_ref, out_ref, *, num_classes, ignore_index,
                  block_rows, sub_rows, numel, inner):
    """One fused sweep: histogram counts + masked BCE partial sums.

    out_ref is a (NUM_STATS*8, 128) per-chunk accumulator, resident across the inner
    ("arbitrary") grid axis.  8-row slot q holds per-lane partial sums of:
      0: count(t == 0)                  1: count(t == 1)
      2: count(2 <= t <= nc-1)          3: sum BCE where t==0 (not ignored)
      4: sum BCE where t==1 (not ign.)  5: sum BCE over all non-ignored elements
    """
    c = pl.program_id(0)
    s = pl.program_id(1)

    @pl.when(s == 0)
    def _():
        out_ref[...] = jnp.zeros_like(out_ref)

    block_elems = block_rows * LANES
    blk = c * inner + s                       # un-clamped logical block id
    rem = numel - blk * block_elems           # real elements in this block (may be <= 0)

    n_sub = block_rows // sub_rows
    nfold = sub_rows // 8
    track_rest = num_classes > 2
    ign = float(ignore_index)
    ign_is0 = ign == 0.0
    ign_is1 = ign == 1.0
    slots = (0, 1, 2, 3, 4, 5) if track_rest else (0, 1, 3, 4, 5)

    def sub_stats(i, masked):
        start = pl.multiple_of(i * sub_rows, sub_rows)
        x = x_ref[pl.ds(start, sub_rows), :].astype(jnp.float32)
        t = t_ref[pl.ds(start, sub_rows), :].astype(jnp.float32)

        # numerically stable BCE with logits: max(x,0) - x*t + log(1 + exp(-|x|))
        per = jnp.maximum(x, 0.0) - x * t + jnp.log(1.0 + jnp.exp(-jnp.abs(x)))

        is0 = t == 0.0                        # histc counts (include ignored values
        is1 = t == 1.0                        # only if they fall inside [0, nc-1])
        valid = t != ign                      # weight-0 (ignored) elements excluded from sums
        rest = ((t >= 2.0) & (t <= float(num_classes - 1))) if track_rest else None

        if masked:
            # Element-index mask: drops the lane-pad tail, the partial last block and
            # clamped duplicate grid steps.  The jnp.where selects below also keep any
            # NaN/Inf garbage read from the out-of-bounds region out of the sums.
            lin = (lax.broadcasted_iota(jnp.int32, (sub_rows, LANES), 0) * LANES
                   + lax.broadcasted_iota(jnp.int32, (sub_rows, LANES), 1))
            inb = lin < (rem - i * (sub_rows * LANES))
            is0 = is0 & inb
            is1 = is1 & inb
            valid = valid & inb
            if track_rest:
                rest = rest & inb

        # S0 / S1 must exclude ignored elements; only needed when ignore_index is 0 or 1.
        m0 = (is0 & valid) if ign_is0 else is0
        m1 = (is1 & valid) if ign_is1 else is1

        vals = [is0.astype(jnp.float32), is1.astype(jnp.float32)]
        if track_rest:
            vals.append(rest.astype(jnp.float32))
        vals += [jnp.where(m0, per, 0.0),      # S0
                 jnp.where(m1, per, 0.0),      # S1
                 jnp.where(valid, per, 0.0)]   # S_valid

        # fold (sub_rows,128) -> (8,128): pure VPU adds, stays in vregs
        return [jnp.sum(v.reshape(nfold, 8, LANES), axis=0) for v in vals]

    def run(masked):
        def body(i, accs):
            return tuple(a + f for a, f in zip(accs, sub_stats(i, masked)))
        init = tuple(jnp.zeros((8, LANES), jnp.float32) for _ in slots)
        accs = lax.fori_loop(0, n_sub, body, init)
        for q, a in zip(slots, accs):
            out_ref[q * 8:(q + 1) * 8, :] += a

    @pl.when(rem >= block_elems)       # interior block: no masking work at all
    def _():
        run(masked=False)

    @pl.when(rem < block_elems)        # boundary / duplicate block: element masking
    def _():
        run(masked=True)


def batch_weighted_bce_loss(logits, target, *, num_classes=2, reduction="mean",
                            ignore_index=255):
    assert logits.shape == target.shape
    assert num_classes >= 2
    numel = math.prod(logits.shape)
    # int32 in-kernel element-index masking; per-lane f32 accumulation is exact well past this.
    assert 0 < numel < 2**31 - 2 * MAX_BLOCK_ROWS * LANES

    x_flat = logits.reshape(-1)
    t_flat = target.reshape(-1)        # keep native dtype in HBM (uint8 targets stay 1 B/elem)

    def _row_align(dt):
        return max(8, 32 // jnp.dtype(dt).itemsize)   # f32 -> 8, bf16 -> 16, (u)int8 -> 32
    row_align = max(_row_align(logits.dtype), _row_align(target.dtype))

    rows_pad = pl.cdiv(numel, row_align * LANES) * row_align
    total = rows_pad * LANES
    if total != numel:
        # Pad only up to one minimal (row_align, 128) tile (no copy at all when numel is
        # already tile-aligned).  Pad value is irrelevant: the kernel masks by true element
        # index, so padding can never corrupt the histogram even if ignore_index < nc.
        x_flat = jnp.pad(x_flat, (0, total - numel))
        t_flat = jnp.pad(t_flat, (0, total - numel))

    x2 = x_flat.reshape(rows_pad, LANES)
    t2 = t_flat.reshape(rows_pad, LANES)

    block_rows = min(MAX_BLOCK_ROWS, rows_pad)
    sub_rows = math.gcd(block_rows, SUB_ROWS)
    blocks_needed = pl.cdiv(rows_pad, block_rows)
    num_chunks = 2 if blocks_needed >= 2 else 1     # leading parallel axis (v7x dual-TC split)
    inner = pl.cdiv(blocks_needed, num_chunks)

    def in_map(c, s):
        # Clamp so the (rare) trailing duplicate step never issues a fully out-of-bounds DMA;
        # its contributions are masked to zero inside the kernel.
        return (jnp.minimum(c * inner + s, blocks_needed - 1), 0)

    kernel = functools.partial(
        _fused_kernel, num_classes=num_classes, ignore_index=ignore_index,
        block_rows=block_rows, sub_rows=sub_rows, numel=numel, inner=inner)

    partials = pl.pallas_call(
        kernel,
        out_shape=jax.ShapeDtypeStruct((num_chunks * NUM_STATS * 8, LANES), jnp.float32),
        grid_spec=pltpu.PrefetchScalarGridSpec(
            num_scalar_prefetch=0,
            grid=(num_chunks, inner),
            in_specs=[pl.BlockSpec((block_rows, LANES), in_map),
                      pl.BlockSpec((block_rows, LANES), in_map)],
            out_specs=pl.BlockSpec((NUM_STATS * 8, LANES), lambda c, s: (c, 0)),
        ),
        compiler_params=pltpu.CompilerParams(
            dimension_semantics=("parallel", "arbitrary"),
            vmem_limit_bytes=32 * 1024 * 1024),
    )(x2, t2)

    # tiny final combine in plain JAX
    stats = partials.reshape(num_chunks, NUM_STATS, 8, LANES).sum(axis=(0, 2, 3))
    h0, h1, hrest = stats[0], stats[1], stats[2]
    s0, s1, svalid = stats[3], stats[4], stats[5]
    hsum = h0 + h1 + hrest                 # histc(target, nc, 0, nc-1).sum()
    sother = svalid - s0 - s1              # weight-1 elements
    loss_sum = (h1 * s0 + h0 * s1 + sother) / hsum

    if reduction == "mean":
        return loss_sum / jnp.float32(numel)   # PyTorch divides by numel (incl. ignored)
    elif reduction == "sum":
        return loss_sum
    else:
        # TODO(synk): reduction='none' (per-element weighted loss map) not implemented here.
        raise NotImplementedError("reduction='none' is not supported by this kernel")


def _reference(x, t, num_classes, ignore_index):
    """Pure-JAX reference mirroring the PyTorch forward (categorical targets)."""
    x = x.astype(jnp.float32)
    t = t.astype(jnp.float32)
    hist = jnp.stack([jnp.sum((t == c).astype(jnp.float32)) for c in range(num_classes)])
    w = jnp.ones_like(t)
    w = jnp.where(t == 0.0, hist[1], w)
    w = jnp.where(t == 1.0, hist[0], w)
    w = jnp.where(t == float(ignore_index), 0.0, w)
    w = w / jnp.sum(hist)
    per = jnp.maximum(x, 0.0) - x * t + jnp.log(1.0 + jnp.exp(-jnp.abs(x)))
    return jnp.mean(w * per)


def _check(loss, ref, name):
    loss = jax.block_until_ready(loss)
    ref = jax.block_until_ready(ref)
    assert jnp.allclose(loss, ref, rtol=1e-5, atol=1e-6), (name, float(loss), float(ref))


if __name__ == "__main__":
    key = jax.random.PRNGKey(0)
    ks = jax.random.split(key, 12)

    # 1) main test: NCHW, f32 target, tile-aligned (no pad, single-block fast path)
    B, C, H, W = 2, 4, 16, 16
    logits = jax.random.normal(ks[0], (B, C, H, W), jnp.float32)
    tgt01 = jax.random.bernoulli(ks[1], 0.35, (B, C, H, W)).astype(jnp.float32)
    ign = jax.random.bernoulli(ks[2], 0.10, (B, C, H, W))
    target = jnp.where(ign, jnp.float32(255.0), tgt01)          # values in {0, 1, 255}
    _check(batch_weighted_bce_loss(logits, target, num_classes=2),
           _reference(logits, target, 2, 255), "main")

    # 2) ragged shape: exercises the minimal-pad + in-kernel tail-masking path
    shp = (2, 3, 7, 11)
    logits2 = jax.random.normal(ks[3], shp, jnp.float32)
    tgt2 = jnp.where(jax.random.bernoulli(ks[4], 0.15, shp), jnp.float32(255.0),
                     jax.random.bernoulli(ks[5], 0.5, shp).astype(jnp.float32))
    _check(batch_weighted_bce_loss(logits2, tgt2, num_classes=2),
           _reference(logits2, tgt2, 2, 255), "ragged")

    # 3) uint8 target kept narrow in HBM (row_align=32 tiling + masked path)
    tgt_u8 = jnp.where(jax.random.bernoulli(ks[6], 0.1, (B, C, H, W)), jnp.uint8(255),
                       jax.random.bernoulli(ks[7], 0.4, (B, C, H, W)).astype(jnp.uint8))
    _check(batch_weighted_bce_loss(logits, tgt_u8, num_classes=2),
           _reference(logits, tgt_u8, 2, 255), "uint8_target")

    # 4) multi-block coverage: 3 blocks -> 2 chunks, partial boundary block and one
    #    clamped duplicate grid step (all masked in-kernel).
    shp4 = (2, 4, 512, 320)
    logits4 = jax.random.normal(ks[8], shp4, jnp.float32)
    tgt4 = jnp.where(jax.random.bernoulli(ks[9], 0.12, shp4), jnp.float32(255.0),
                     jax.random.bernoulli(ks[10], 0.3, shp4).astype(jnp.float32))
    _check(batch_weighted_bce_loss(logits4, tgt4, num_classes=2),
           _reference(logits4, tgt4, 2, 255), "multiblock")

    print("KERNEL_OK")
</pallas_src>

<mosaic_0001>
module attributes {stable_mosaic.version = 11 : i64} {
  func.func @_fused_kernel(%arg0: i32, %arg1: i32, %arg2: memref<16x128xf32, #tpu.memory_space<vmem>>, %arg3: memref<16x128xf32, #tpu.memory_space<vmem>>, %arg4: memref<48x128xf32, #tpu.memory_space<vmem>>) attributes {dimension_semantics = [#tpu.dimension_semantics<parallel>, #tpu.dimension_semantics<arbitrary>], iteration_bounds = array<i64: 1, 1>, scalar_prefetch = 0 : i64, scratch_operands = 0 : i64, tpu.core_type = #tpu.core_type<tc>, window_params = [{transform_indices = @transform_0, window_bounds = array<i64: 16, 128>}, {transform_indices = @transform_1, window_bounds = array<i64: 16, 128>}, {transform_indices = @transform_2, window_bounds = array<i64: 48, 128>}]} {
    %c0_i32 = arith.constant 0 : i32
    %0 = arith.cmpi eq, %arg1, %c0_i32 : i32
    %1 = arith.extui %0 : i1 to i32
    %c0_i32_0 = arith.constant 0 : i32
    %2 = arith.cmpi ne, %1, %c0_i32_0 : i32
    scf.if %2 {
      %cst = arith.constant 0.000000e+00 : f32
      %13 = vector.broadcast %cst : f32 to vector<48x128xf32>
      %c0 = arith.constant 0 : index
      %c0_6 = arith.constant 0 : index
      %14 = vector.load %arg4[%c0, %c0_6] : memref<48x128xf32, #tpu.memory_space<vmem>>, vector<48x128xf32>
      tpu.vector_store %arg4[%c0, %c0_6], %13 {strides = array<i32>} : memref<48x128xf32, #tpu.memory_space<vmem>>, vector<48x128xf32>,
    } else {
    }
    %c1_i32 = arith.constant 1 : i32
    %3 = arith.muli %arg0, %c1_i32 : i32
    %4 = arith.addi %3, %arg1 : i32
    %c2048_i32 = arith.constant 2048 : i32
    %5 = arith.muli %4, %c2048_i32 : i32
    %c2048_i32_1 = arith.constant 2048 : i32
    %6 = arith.subi %c2048_i32_1, %5 : i32
    %c2048_i32_2 = arith.constant 2048 : i32
    %7 = arith.cmpi sge, %6, %c2048_i32_2 : i32
    %8 = arith.extui %7 : i1 to i32
    %c0_i32_3 = arith.constant 0 : i32
    %9 = arith.cmpi ne, %8, %c0_i32_3 : i32
    scf.if %9 {
      %cst = arith.constant 0.000000e+00 : f32
      %13 = vector.broadcast %cst : f32 to vector<8x128xf32>
      %cst_6 = arith.constant 0.000000e+00 : f32
      %14 = vector.broadcast %cst_6 : f32 to vector<8x128xf32>
      %cst_7 = arith.constant 0.000000e+00 : f32
      %15 = vector.broadcast %cst_7 : f32 to vector<8x128xf32>
      %cst_8 = arith.constant 0.000000e+00 : f32
      %16 = vector.broadcast %cst_8 : f32 to vector<8x128xf32>
      %cst_9 = arith.constant 0.000000e+00 : f32
      %17 = vector.broadcast %cst_9 : f32 to vector<8x128xf32>
      %c0_i32_10 = arith.constant 0 : i32
      %c16_i32 = arith.constant 16 : i32
      %18 = arith.muli %c0_i32_10, %c16_i32 : i32
      %19 = tpu.assume_multiple %18, 16 : i32
      %20 = arith.index_cast %19 : i32 to index
      %c0 = arith.constant 0 : index
      %21 = vector.load %arg2[%20, %c0] : memref<16x128xf32, #tpu.memory_space<vmem>>, vector<16x128xf32>
      %22 = arith.index_cast %19 : i32 to index
      %c0_11 = arith.constant 0 : index
      %23 = vector.load %arg3[%22, %c0_11] : memref<16x128xf32, #tpu.memory_space<vmem>>, vector<16x128xf32>
      %cst_12 = arith.constant 0.000000e+00 : f32
      %24 = vector.broadcast %cst_12 : f32 to vector<16x128xf32>
      %25 = arith.maximumf %21, %24 : vector<16x128xf32>
      %26 = arith.mulf %21, %23 : vector<16x128xf32>
      %27 = arith.subf %25, %26 : vector<16x128xf32>
      %28 = math.absf %21 : vector<16x128xf32>
      %cst_13 = arith.constant 0.000000e+00 : f32
      %29 = vector.broadcast %cst_13 : f32 to vector<16x128xf32>
      %30 = arith.subf %29, %28 : vector<16x128xf32>
      %31 = math.exp %30 : vector<16x128xf32>
      %cst_14 = arith.constant 1.000000e+00 : f32
      %32 = vector.broadcast %cst_14 : f32 to vector<16x128xf32>
      %33 = arith.addf %32, %31 : vector<16x128xf32>
      %34 = math.log %33 : vector<16x128xf32>
      %35 = arith.addf %27, %34 : vector<16x128xf32>
      %cst_15 = arith.constant 0.000000e+00 : f32
      %36 = vector.broadcast %cst_15 : f32 to vector<16x128xf32>
      %37 = arith.cmpf oeq, %23, %36 : vector<16x128xf32>
      %cst_16 = arith.constant 1.000000e+00 : f32
      %38 = vector.broadcast %cst_16 : f32 to vector<16x128xf32>
      %39 = arith.cmpf oeq, %23, %38 : vector<16x128xf32>
      %cst_17 = arith.constant 2.550000e+02 : f32
      %40 = vector.broadcast %cst_17 : f32 to vector<16x128xf32>
      %41 = arith.cmpf one, %23, %40 : vector<16x128xf32>
      %42 = arith.extui %37 : vector<16x128xi1> to vector<16x128xi32>
      %43 = arith.sitofp %42 : vector<16x128xi32> to vector<16x128xf32>
      %44 = arith.extui %39 : vector<16x128xi1> to vector<16x128xi32>
      %45 = arith.sitofp %44 : vector<16x128xi32> to vector<16x128xf32>
      %cst_18 = arith.constant 0.000000e+00 : f32
      %46 = vector.broadcast %cst_18 : f32 to vector<16x128xf32>
      %47 = arith.select %37, %35, %46 : vector<16x128xi1>, vector<16x128xf32>
      %cst_19 = arith.constant 0.000000e+00 : f32
      %48 = vector.broadcast %cst_19 : f32 to vector<16x128xf32>
      %49 = arith.select %39, %35, %48 : vector<16x128xi1>, vector<16x128xf32>
      %cst_20 = arith.constant 0.000000e+00 : f32
      %50 = vector.broadcast %cst_20 : f32 to vector<16x128xf32>
      %51 = arith.select %41, %35, %50 : vector<16x128xi1>, vector<16x128xf32>
      %52 = vector.shape_cast %43 : vector<16x128xf32> to vector<2x8x128xf32>
      %cst_21 = arith.constant dense<0.000000e+00> : vector<8x128xf32>
      %53 = vector.multi_reduction <add>, %52, %cst_21 [0] : vector<2x8x128xf32> to vector<8x128xf32>
      %54 = vector.shape_cast %45 : vector<16x128xf32> to vector<2x8x128xf32>
      %cst_22 = arith.constant dense<0.000000e+00> : vector<8x128xf32>
      %55 = vector.multi_reduction <add>, %54, %cst_22 [0] : vector<2x8x128xf32> to vector<8x128xf32>
      %56 = vector.shape_cast %47 : vector<16x128xf32> to vector<2x8x128xf32>
      %cst_23 = arith.constant dense<0.000000e+00> : vector<8x128xf32>
      %57 = vector.multi_reduction <add>, %56, %cst_23 [0] : vector<2x8x128xf32> to vector<8x128xf32>
      %58 = vector.shape_cast %49 : vector<16x128xf32> to vector<2x8x128xf32>
      %cst_24 = arith.constant dense<0.000000e+00> : vector<8x128xf32>
      %59 = vector.multi_reduction <add>, %58, %cst_24 [0] : vector<2x8x128xf32> to vector<8x128xf32>
      %60 = vector.shape_cast %51 : vector<16x128xf32> to vector<2x8x128xf32>
      %cst_25 = arith.constant dense<0.000000e+00> : vector<8x128xf32>
      %61 = vector.multi_reduction <add>, %60, %cst_25 [0] : vector<2x8x128xf32> to vector<8x128xf32>
      %62 = arith.addf %13, %53 : vector<8x128xf32>
      %63 = arith.addf %14, %55 : vector<8x128xf32>
      %64 = arith.addf %15, %57 : vector<8x128xf32>
      %65 = arith.addf %16, %59 : vector<8x128xf32>
      %66 = arith.addf %17, %61 : vector<8x128xf32>
      %c1_i32_26 = arith.constant 1 : i32
      %c0_27 = arith.constant 0 : index
      %c0_28 = arith.constant 0 : index
      %67 = vector.load %arg4[%c0_27, %c0_28] : memref<48x128xf32, #tpu.memory_space<vmem>>, vector<8x128xf32>
      %68 = arith.addf %67, %62 : vector<8x128xf32>
      %c0_29 = arith.constant 0 : index
      %c0_30 = arith.constant 0 : index
      %69 = vector.load %arg4[%c0_29, %c0_30] : memref<48x128xf32, #tpu.memory_space<vmem>>, vector<8x128xf32>
      tpu.vector_store %arg4[%c0_29, %c0_30], %68 {strides = array<i32>} : memref<48x128xf32, #tpu.memory_space<vmem>>, vector<8x128xf32>,
      %c8 = arith.constant 8 : index
      %c0_31 = arith.constant 0 : index
      %70 = vector.load %arg4[%c8, %c0_31] : memref<48x128xf32, #tpu.memory_space<vmem>>, vector<8x128xf32>
      %71 = arith.addf %70, %63 : vector<8x128xf32>
      %c8_32 = arith.constant 8 : index
      %c0_33 = arith.constant 0 : index
      %72 = vector.load %arg4[%c8_32, %c0_33] : memref<48x128xf32, #tpu.memory_space<vmem>>, vector<8x128xf32>
      tpu.vector_store %arg4[%c8_32, %c0_33], %71 {strides = array<i32>} : memref<48x128xf32, #tpu.memory_space<vmem>>, vector<8x128xf32>,
      %c24 = arith.constant 24 : index
      %c0_34 = arith.constant 0 : index
      %73 = vector.load %arg4[%c24, %c0_34] : memref<48x128xf32, #tpu.memory_space<vmem>>, vector<8x128xf32>
      %74 = arith.addf %73, %64 : vector<8x128xf32>
      %c24_35 = arith.constant 24 : index
      %c0_36 = arith.constant 0 : index
      %75 = vector.load %arg4[%c24_35, %c0_36] : memref<48x128xf32, #tpu.memory_space<vmem>>, vector<8x128xf32>
      tpu.vector_store %arg4[%c24_35, %c0_36], %74 {strides = array<i32>} : memref<48x128xf32, #tpu.memory_space<vmem>>, vector<8x128xf32>,
      %c32 = arith.constant 32 : index
      %c0_37 = arith.constant 0 : index
      %76 = vector.load %arg4[%c32, %c0_37] : memref<48x128xf32, #tpu.memory_space<vmem>>, vector<8x128xf32>
      %77 = arith.addf %76, %65 : vector<8x128xf32>
      %c32_38 = arith.constant 32 : index
      %c0_39 = arith.constant 0 : index
      %78 = vector.load %arg4[%c32_38, %c0_39] : memref<48x128xf32, #tpu.memory_space<vmem>>, vector<8x128xf32>
      tpu.vector_store %arg4[%c32_38, %c0_39], %77 {strides = array<i32>} : memref<48x128xf32, #tpu.memory_space<vmem>>, vector<8x128xf32>,
      %c40 = arith.constant 40 : index
      %c0_40 = arith.constant 0 : index
      %79 = vector.load %arg4[%c40, %c0_40] : memref<48x128xf32, #tpu.memory_space<vmem>>, vector<8x128xf32>
      %80 = arith.addf %79, %66 : vector<8x128xf32>
      %c40_41 = arith.constant 40 : index
      %c0_42 = arith.constant 0 : index
      %81 = vector.load %arg4[%c40_41, %c0_42] : memref<48x128xf32, #tpu.memory_space<vmem>>, vector<8x128xf32>
      tpu.vector_store %arg4[%c40_41, %c0_42], %80 {strides = array<i32>} : memref<48x128xf32, #tpu.memory_space<vmem>>, vector<8x128xf32>,
    } else {
    }
    %c2048_i32_4 = arith.constant 2048 : i32
    %10 = arith.cmpi slt, %6, %c2048_i32_4 : i32
    %11 = arith.extui %10 : i1 to i32
    %c0_i32_5 = arith.constant 0 : i32
    %12 = arith.cmpi ne, %11, %c0_i32_5 : i32
    scf.if %12 {
      %cst = arith.constant 0.000000e+00 : f32
      %13 = vector.broadcast %cst : f32 to vector<8x128xf32>
      %cst_6 = arith.constant 0.000000e+00 : f32
      %14 = vector.broadcast %cst_6 : f32 to vector<8x128xf32>
      %cst_7 = arith.constant 0.000000e+00 : f32
      %15 = vector.broadcast %cst_7 : f32 to vector<8x128xf32>
      %cst_8 = arith.constant 0.000000e+00 : f32
      %16 = vector.broadcast %cst_8 : f32 to vector<8x128xf32>
      %cst_9 = arith.constant 0.000000e+00 : f32
      %17 = vector.broadcast %cst_9 : f32 to vector<8x128xf32>
      %c0_i32_10 = arith.constant 0 : i32
      %c16_i32 = arith.constant 16 : i32
      %18 = arith.muli %c0_i32_10, %c16_i32 : i32
      %19 = tpu.assume_multiple %18, 16 : i32
      %20 = arith.index_cast %19 : i32 to index
      %c0 = arith.constant 0 : index
      %21 = vector.load %arg2[%20, %c0] : memref<16x128xf32, #tpu.memory_space<vmem>>, vector<16x128xf32>
      %22 = arith.index_cast %19 : i32 to index
      %c0_11 = arith.constant 0 : index
      %23 = vector.load %arg3[%22, %c0_11] : memref<16x128xf32, #tpu.memory_space<vmem>>, vector<16x128xf32>
      %cst_12 = arith.constant 0.000000e+00 : f32
      %24 = vector.broadcast %cst_12 : f32 to vector<16x128xf32>
      %25 = arith.maximumf %21, %24 : vector<16x128xf32>
      %26 = arith.mulf %21, %23 : vector<16x128xf32>
      %27 = arith.subf %25, %26 : vector<16x128xf32>
      %28 = math.absf %21 : vector<16x128xf32>
      %cst_13 = arith.constant 0.000000e+00 : f32
      %29 = vector.broadcast %cst_13 : f32 to vector<16x128xf32>
      %30 = arith.subf %29, %28 : vector<16x128xf32>
      %31 = math.exp %30 : vector<16x128xf32>
      %cst_14 = arith.constant 1.000000e+00 : f32
      %32 = vector.broadcast %cst_14 : f32 to vector<16x128xf32>
      %33 = arith.addf %32, %31 : vector<16x128xf32>
      %34 = math.log %33 : vector<16x128xf32>
      %35 = arith.addf %27, %34 : vector<16x128xf32>
      %cst_15 = arith.constant 0.000000e+00 : f32
      %36 = vector.broadcast %cst_15 : f32 to vector<16x128xf32>
      %37 = arith.cmpf oeq, %23, %36 : vector<16x128xf32>
      %cst_16 = arith.constant 1.000000e+00 : f32
      %38 = vector.broadcast %cst_16 : f32 to vector<16x128xf32>
      %39 = arith.cmpf oeq, %23, %38 : vector<16x128xf32>
      %cst_17 = arith.constant 2.550000e+02 : f32
      %40 = vector.broadcast %cst_17 : f32 to vector<16x128xf32>
      %41 = arith.cmpf one, %23, %40 : vector<16x128xf32>
      %42 = tpu.iota {dimensions = array<i32: 0>} : vector<16x128xi32>
      %c128_i32 = arith.constant 128 : i32
      %43 = vector.broadcast %c128_i32 : i32 to vector<16x128xi32>
      %44 = arith.muli %42, %43 : vector<16x128xi32>
      %45 = tpu.iota {dimensions = array<i32: 1>} : vector<16x128xi32>
      %46 = arith.addi %44, %45 : vector<16x128xi32>
      %c2048_i32_18 = arith.constant 2048 : i32
      %47 = arith.muli %c0_i32_10, %c2048_i32_18 : i32
      %48 = arith.subi %6, %47 : i32
      %49 = vector.broadcast %48 : i32 to vector<16x128xi32>
      %50 = arith.cmpi slt, %46, %49 : vector<16x128xi32>
      %51 = arith.andi %37, %50 : vector<16x128xi1>
      %52 = arith.andi %39, %50 : vector<16x128xi1>
      %53 = arith.andi %41, %50 : vector<16x128xi1>
      %54 = arith.extui %51 : vector<16x128xi1> to vector<16x128xi32>
      %55 = arith.sitofp %54 : vector<16x128xi32> to vector<16x128xf32>
      %56 = arith.extui %52 : vector<16x128xi1> to vector<16x128xi32>
      %57 = arith.sitofp %56 : vector<16x128xi32> to vector<16x128xf32>
      %cst_19 = arith.constant 0.000000e+00 : f32
      %58 = vector.broadcast %cst_19 : f32 to vector<16x128xf32>
      %59 = arith.select %51, %35, %58 : vector<16x128xi1>, vector<16x128xf32>
      %cst_20 = arith.constant 0.000000e+00 : f32
      %60 = vector.broadcast %cst_20 : f32 to vector<16x128xf32>
      %61 = arith.select %52, %35, %60 : vector<16x128xi1>, vector<16x128xf32>
      %cst_21 = arith.constant 0.000000e+00 : f32
      %62 = vector.broadcast %cst_21 : f32 to vector<16x128xf32>
      %63 = arith.select %53, %35, %62 : vector<16x128xi1>, vector<16x128xf32>
      %64 = vector.shape_cast %55 : vector<16x128xf32> to vector<2x8x128xf32>
      %cst_22 = arith.constant dense<0.000000e+00> : vector<8x128xf32>
      %65 = vector.multi_reduction <add>, %64, %cst_22 [0] : vector<2x8x128xf32> to vector<8x128xf32>
      %66 = vector.shape_cast %57 : vector<16x128xf32> to vector<2x8x128xf32>
      %cst_23 = arith.constant dense<0.000000e+00> : vector<8x128xf32>
      %67 = vector.multi_reduction <add>, %66, %cst_23 [0] : vector<2x8x128xf32> to vector<8x128xf32>
      %68 = vector.shape_cast %59 : vector<16x128xf32> to vector<2x8x128xf32>
      %cst_24 = arith.constant dense<0.000000e+00> : vector<8x128xf32>
      %69 = vector.multi_reduction <add>, %68, %cst_24 [0] : vector<2x8x128xf32> to vector<8x128xf32>
      %70 = vector.shape_cast %61 : vector<16x128xf32> to vector<2x8x128xf32>
      %cst_25 = arith.constant dense<0.000000e+00> : vector<8x128xf32>
      %71 = vector.multi_reduction <add>, %70, %cst_25 [0] : vector<2x8x128xf32> to vector<8x128xf32>
      %72 = vector.shape_cast %63 : vector<16x128xf32> to vector<2x8x128xf32>
      %cst_26 = arith.constant dense<0.000000e+00> : vector<8x128xf32>
      %73 = vector.multi_reduction <add>, %72, %cst_26 [0] : vector<2x8x128xf32> to vector<8x128xf32>
      %74 = arith.addf %13, %65 : vector<8x128xf32>
      %75 = arith.addf %14, %67 : vector<8x128xf32>
      %76 = arith.addf %15, %69 : vector<8x128xf32>
      %77 = arith.addf %16, %71 : vector<8x128xf32>
      %78 = arith.addf %17, %73 : vector<8x128xf32>
      %c1_i32_27 = arith.constant 1 : i32
      %c0_28 = arith.constant 0 : index
      %c0_29 = arith.constant 0 : index
      %79 = vector.load %arg4[%c0_28, %c0_29] : memref<48x128xf32, #tpu.memory_space<vmem>>, vector<8x128xf32>
      %80 = arith.addf %79, %74 : vector<8x128xf32>
      %c0_30 = arith.constant 0 : index
      %c0_31 = arith.constant 0 : index
      %81 = vector.load %arg4[%c0_30, %c0_31] : memref<48x128xf32, #tpu.memory_space<vmem>>, vector<8x128xf32>
      tpu.vector_store %arg4[%c0_30, %c0_31], %80 {strides = array<i32>} : memref<48x128xf32, #tpu.memory_space<vmem>>, vector<8x128xf32>,
      %c8 = arith.constant 8 : index
      %c0_32 = arith.constant 0 : index
      %82 = vector.load %arg4[%c8, %c0_32] : memref<48x128xf32, #tpu.memory_space<vmem>>, vector<8x128xf32>
      %83 = arith.addf %82, %75 : vector<8x128xf32>
      %c8_33 = arith.constant 8 : index
      %c0_34 = arith.constant 0 : index
      %84 = vector.load %arg4[%c8_33, %c0_34] : memref<48x128xf32, #tpu.memory_space<vmem>>, vector<8x128xf32>
      tpu.vector_store %arg4[%c8_33, %c0_34], %83 {strides = array<i32>} : memref<48x128xf32, #tpu.memory_space<vmem>>, vector<8x128xf32>,
      %c24 = arith.constant 24 : index
      %c0_35 = arith.constant 0 : index
      %85 = vector.load %arg4[%c24, %c0_35] : memref<48x128xf32, #tpu.memory_space<vmem>>, vector<8x128xf32>
      %86 = arith.addf %85, %76 : vector<8x128xf32>
      %c24_36 = arith.constant 24 : index
      %c0_37 = arith.constant 0 : index
      %87 = vector.load %arg4[%c24_36, %c0_37] : memref<48x128xf32, #tpu.memory_space<vmem>>, vector<8x128xf32>
      tpu.vector_store %arg4[%c24_36, %c0_37], %86 {strides = array<i32>} : memref<48x128xf32, #tpu.memory_space<vmem>>, vector<8x128xf32>,
      %c32 = arith.constant 32 : index
      %c0_38 = arith.constant 0 : index
      %88 = vector.load %arg4[%c32, %c0_38] : memref<48x128xf32, #tpu.memory_space<vmem>>, vector<8x128xf32>
      %89 = arith.addf %88, %77 : vector<8x128xf32>
      %c32_39 = arith.constant 32 : index
      %c0_40 = arith.constant 0 : index
      %90 = vector.load %arg4[%c32_39, %c0_40] : memref<48x128xf32, #tpu.memory_space<vmem>>, vector<8x128xf32>
      tpu.vector_store %arg4[%c32_39, %c0_40], %89 {strides = array<i32>} : memref<48x128xf32, #tpu.memory_space<vmem>>, vector<8x128xf32>,
      %c40 = arith.constant 40 : index
      %c0_41 = arith.constant 0 : index
      %91 = vector.load %arg4[%c40, %c0_41] : memref<48x128xf32, #tpu.memory_space<vmem>>, vector<8x128xf32>
      %92 = arith.addf %91, %78 : vector<8x128xf32>
      %c40_42 = arith.constant 40 : index
      %c0_43 = arith.constant 0 : index
      %93 = vector.load %arg4[%c40_42, %c0_43] : memref<48x128xf32, #tpu.memory_space<vmem>>, vector<8x128xf32>
      tpu.vector_store %arg4[%c40_42, %c0_43], %92 {strides = array<i32>} : memref<48x128xf32, #tpu.memory_space<vmem>>, vector<8x128xf32>,
    } else {
    }
    return
  }
  func.func @transform_0(%arg0: i32, %arg1: i32) -> (i32, i32) {
    %c1_i32 = arith.constant 1 : i32
    %0 = arith.muli %arg0, %c1_i32 : i32
    %1 = arith.addi %0, %arg1 : i32
    %c0_i32 = arith.constant 0 : i32
    %2 = arith.minsi %1, %c0_i32 : i32
    %c0_i32_0 = arith.constant 0 : i32
    %c0_i32_1 = arith.constant 0 : i32
    return %2, %c0_i32_0 : i32, i32
  }
  func.func @transform_1(%arg0: i32, %arg1: i32) -> (i32, i32) {
    %c1_i32 = arith.constant 1 : i32
    %0 = arith.muli %arg0, %c1_i32 : i32
    %1 = arith.addi %0, %arg1 : i32
    %c0_i32 = arith.constant 0 : i32
    %2 = arith.minsi %1, %c0_i32 : i32
    %c0_i32_0 = arith.constant 0 : i32
    %c0_i32_1 = arith.constant 0 : i32
    return %2, %c0_i32_0 : i32, i32
  }
  func.func @transform_2(%arg0: i32, %arg1: i32) -> (i32, i32) {
    %c0_i32 = arith.constant 0 : i32
    %c0_i32_0 = arith.constant 0 : i32
    return %arg0, %c0_i32 : i32, i32
  }
}

</mosaic_0001>

<llo_original>
// kernel: tpu_custom_call.1
$region0: #{tpu_custom_call.1}
  #allocation0 [shape = 'u32[]', space=smem, size = 0x4, offset = 0x4, fixed_abs, tag = 'smem constant byte address 0x4 - core index']
  #allocation1 [shape = 'u32[144,128]{1,0:T(1,128)}', space=vmem, size = 0x12000, scoped, tag = 'internal scratch']
  %s0 = inlined_call_operand.hbm [shape: f32[16,128], index: 0, kind: input, shape index: {}]
  %s1 = inlined_call_operand.hbm [shape: f32[16,128], index: 1, kind: input, shape index: {}]
  %s2 = inlined_call_operand.hbm [shape: f32[48,128], index: 2, kind: output, shape index: {}]
  %s3 = sld [smem:[#allocation0]]
  $region38: #{tpu_custom_call.1} parent=0
    _
  %s5 = ssub.s32 1, %s3
  %s6 = scalar_select 0, %s5, %s3
  $region1: #{tpu_custom_call.1} parent=0
    #allocation2 [shape = 'u8[8192]{0}', space=vmem, size = 0x2000, scoped, tag = 'input window, operand 0, single buffered']
    #allocation3 [shape = 's32[1]{0}', space=sflag, size = 0x4, scoped, tag = 'scoped memory for tpu_custom_call.1']
    #allocation4 [shape = 's32[1]{0}', space=sflag, size = 0x4, scoped, tag = 'scoped memory for tpu_custom_call.1']
    #allocation5 [shape = 'u8[8192]{0}', space=vmem, size = 0x2000, scoped, tag = 'input window, operand 1, single buffered']
    #allocation6 [shape = 's32[1]{0}', space=sflag, size = 0x4, scoped, tag = 'scoped memory for tpu_custom_call.1']
    #allocation7 [shape = 'u8[24576]{0}', space=vmem, size = 0x6000, scoped, tag = 'output window, operand 0, single buffered']
    %7 = vsyncpa [#allocation3], 0
    %8 = vsyncpa [#allocation6], 0
    %9 = vsyncpa [#allocation4], 0
    // Predicated region
    $region2: #{tpu_custom_call.1} parent=1 // pred_check
      _
    $region3: #{tpu_custom_call.1} parent=1 // pred_check_branch
      %11 = sbr.rel (0) target = $region5
    $region4: #{tpu_custom_call.1} parent=1 // pred_region
      %s12 = sadd.s32 0, 0
      %p13 = scmp.lt.s32.totalorder %s12, 0
      %s14 = scalar_select %p13, %s12, 0
      %s15 = smul.u32 2, %s14
      %s17 = ssub.s32 256, 256
      %18 = vsyncadd [#allocation3], %s17
      %s19 = smul.addr %s15, 128
      %s20 = scalar_lea.hbm %s0, %s19
      %s21 = sshll.u32 [#allocation2], 4
      %s22 = int_to_ptr.vmem [resolvable:$true] %s21
      %27 = dma.hbm_to_vmem [thread:$0]  %s20, 256, %s22, [#allocation3], 128, 128, 8
    $region5: #{tpu_custom_call.1} parent=1 // pred_fallthru
      _
    // Predicated region
    $region6: #{tpu_custom_call.1} parent=1 // pred_check
      _
    $region7: #{tpu_custom_call.1} parent=1 // pred_check_branch
      %29 = sbr.rel (0) target = $region9
    $region8: #{tpu_custom_call.1} parent=1 // pred_region
      %s30 = sadd.s32 0, 0
      %p31 = scmp.lt.s32.totalorder %s30, 0
      %s32 = scalar_select %p31, %s30, 0
      %s33 = smul.u32 2, %s32
      %s35 = ssub.s32 256, 256
      %36 = vsyncadd [#allocation6], %s35
      %s37 = smul.addr %s33, 128
      %s38 = scalar_lea.hbm %s1, %s37
      %s39 = sshll.u32 [#allocation5], 4
      %s40 = int_to_ptr.vmem [resolvable:$true] %s39
      %45 = dma.hbm_to_vmem [thread:$0]  %s38, 256, %s40, [#allocation6], 128, 128, 8
    $region9: #{tpu_custom_call.1} parent=1 // pred_fallthru
      _
    // Predicated region
    $region10: #{tpu_custom_call.1} parent=1 // pred_check
      _
    $region11: #{tpu_custom_call.1} parent=1 // pred_check_branch
      %47 = sbr.rel (0) target = $region13
    $region12: #{tpu_custom_call.1} parent=1 // pred_region
      %48 = dma.done [#allocation3], 256
    $region13: #{tpu_custom_call.1} parent=1 // pred_fallthru
      _
    // Predicated region
    $region14: #{tpu_custom_call.1} parent=1 // pred_check
      _
    $region15: #{tpu_custom_call.1} parent=1 // pred_check_branch
      %50 = sbr.rel (0) target = $region17
    $region16: #{tpu_custom_call.1} parent=1 // pred_region
      %51 = dma.done [#allocation6], 256
    $region17: #{tpu_custom_call.1} parent=1 // pred_fallthru
      _
    %s52 = sadd.s32 0, 0
    %p53 = scmp.lt.s32.totalorder %s52, 0
    %s54 = scalar_select %p53, %s52, 0
    %s55 = smul.u32 2, %s54
    %s56 = sadd.s32 0, 0
    %p57 = scmp.lt.s32.totalorder %s56, 0
    %s58 = scalar_select %p57, %s56, 0
    %s59 = smul.u32 2, %s58
    %p60 = scmp.eq.s32.totalorder 0, 0
    // Predicated region
    $region18: #{tpu_custom_call.1} parent=1 // pred_check
      %p61 = pneg %p60
    $region19: #{tpu_custom_call.1} parent=1 // pred_check_branch
      %63 = sbr.rel (%p61) target = $region21
    $region20: #{tpu_custom_call.1} parent=1 // pred_region
      %64 = vst [vmem:[#allocation7] sm:$0xff] 0.0
      %65 = vst [vmem:[#allocation7 + $0x8] sm:$0xff] 0.0
      %66 = vst [vmem:[#allocation7 + $0x10] sm:$0xff] 0.0
      %67 = vst [vmem:[#allocation7 + $0x18] sm:$0xff] 0.0
      %68 = vst [vmem:[#allocation7 + $0x20] sm:$0xff] 0.0
      %69 = vst [vmem:[#allocation7 + $0x28] sm:$0xff] 0.0
    $region21: #{tpu_custom_call.1} parent=1 // pred_fallthru
      _
    %s70 = sadd.s32 0, 0
    %s71 = smul.u32 %s70, 2048
    %s72 = ssub.s32 2048, %s71
    %p73 = scmp.ge.s32.totalorder %s72, 2048
    // Predicated region
    $region22: #{tpu_custom_call.1} parent=1 // pred_check
      %p74 = pneg %p73
    $region23: #{tpu_custom_call.1} parent=1 // pred_check_branch
      %76 = sbr.rel (%p74) target = $region25
    $region24: #{tpu_custom_call.1} parent=1 // pred_region
      %v77 = vld [vmem:[#allocation2] sm:$0xff]
      %v78 = vld [vmem:[#allocation2 + $0x8] sm:$0xff]
      %v79 = vld [vmem:[#allocation5] sm:$0xff]
      %v80 = vld [vmem:[#allocation5 + $0x8] sm:$0xff]
      %v81 = vmax.f32 %v77, 0.0
      %v82 = vmax.f32 %v78, 0.0
      %v83 = vmul.f32 %v77, %v79
      %v84 = vmul.f32 %v78, %v80
      %v85 = vsub.f32 %v81, %v83
      %v86 = vsub.f32 %v82, %v84
      %v87 = vand.u32 2147483647, %v77
      %v88 = vand.u32 2147483647, %v78
      %v89 = vsub.f32 0.0, %v87
      %v90 = vsub.f32 0.0, %v88
      %v91 = vmul.f32 %v89, 1.442695
      %v92 = vpow.pop %v91
      %v93 = vmul.f32 %v90, 1.442695
      %v94 = vpow.pop %v93
      %v95 = vadd.f32 %v92, 1.0
      %v96 = vadd.f32 %v94, 1.0
      %v97 = vlog2.pop %v95
      %v98 = vmul.f32 %v97, 0.6931472
      %v99 = vlog2.pop %v96
      %v100 = vmul.f32 %v99, 0.6931472
      %v101 = vadd.f32 %v85, %v98
      %v102 = vadd.f32 %v86, %v100
      %vm103 = vcmp.eq.f32.partialorder %v79, 0.0
      %vm104 = vcmp.eq.f32.partialorder %v80, 0.0
      %vm105 = vcmp.eq.f32.partialorder %v79, 1.0
      %vm106 = vcmp.eq.f32.partialorder %v80, 1.0
      %vm107 = vcmp.ne.f32.partialorder %v79, 255.0
      %vm108 = vcmp.ne.f32.partialorder %v80, 255.0
      %v109 = vsel %vm103, 1, 0
      %v110 = vsel %vm104, 1, 0
      %v111 = vcvt.s32.f32 %v109
      %v112 = vcvt.s32.f32 %v110
      %v113 = vsel %vm105, 1, 0
      %v114 = vsel %vm106, 1, 0
      %v115 = vcvt.s32.f32 %v113
      %v116 = vcvt.s32.f32 %v114
      %v117 = vsel %vm103, %v101, 0.0
      %v118 = vsel %vm104, %v102, 0.0
      %v119 = vsel %vm105, %v101, 0.0
      %v120 = vsel %vm106, %v102, 0.0
      %v121 = vsel %vm107, %v101, 0.0
      %v122 = vsel %vm108, %v102, 0.0
      %v123 = vadd.f32 %v111, %v112
      %v124 = vadd.f32 %v115, %v116
      %v125 = vadd.f32 %v117, %v118
      %v126 = vadd.f32 %v119, %v120
      %v127 = vadd.f32 %v121, %v122
      %v128 = vadd.f32 %v123, 0.0
      %v129 = vadd.f32 %v124, 0.0
      %v130 = vadd.f32 %v125, 0.0
      %v131 = vadd.f32 %v126, 0.0
      %v132 = vadd.f32 %v127, 0.0
      %v133 = vld [vmem:[#allocation7] sm:$0xff]
      %v134 = vadd.f32 %v133, %v128
      %135 = vst [vmem:[#allocation7] sm:$0xff] %v134
      %v136 = vld [vmem:[#allocation7 + $0x8] sm:$0xff]
      %v137 = vadd.f32 %v136, %v129
      %138 = vst [vmem:[#allocation7 + $0x8] sm:$0xff] %v137
      %v139 = vld [vmem:[#allocation7 + $0x18] sm:$0xff]
      %v140 = vadd.f32 %v139, %v130
      %141 = vst [vmem:[#allocation7 + $0x18] sm:$0xff] %v140
      %v142 = vld [vmem:[#allocation7 + $0x20] sm:$0xff]
      %v143 = vadd.f32 %v142, %v131
      %144 = vst [vmem:[#allocation7 + $0x20] sm:$0xff] %v143
      %v145 = vld [vmem:[#allocation7 + $0x28] sm:$0xff]
      %v146 = vadd.f32 %v145, %v132
      %147 = vst [vmem:[#allocation7 + $0x28] sm:$0xff] %v146
    $region25: #{tpu_custom_call.1} parent=1 // pred_fallthru
      _
    %p148 = scmp.lt.s32.totalorder %s72, 2048
    // Predicated region
    $region26: #{tpu_custom_call.1} parent=1 // pred_check
      %p149 = pneg %p148
    $region27: #{tpu_custom_call.1} parent=1 // pred_check_branch
      %151 = sbr.rel (%p149) target = $region29
    $region28: #{tpu_custom_call.1} parent=1 // pred_region
      %v152 = vld [vmem:[#allocation2] sm:$0xff]
      %v153 = vld [vmem:[#allocation2 + $0x8] sm:$0xff]
      %v154 = vld [vmem:[#allocation5] sm:$0xff]
      %v155 = vld [vmem:[#allocation5 + $0x8] sm:$0xff]
      %v156 = vmax.f32 %v152, 0.0
      %v157 = vmax.f32 %v153, 0.0
      %v158 = vmul.f32 %v152, %v154
      %v159 = vmul.f32 %v153, %v155
      %v160 = vsub.f32 %v156, %v158
      %v161 = vsub.f32 %v157, %v159
      %v162 = vand.u32 2147483647, %v152
      %v163 = vand.u32 2147483647, %v153
      %v164 = vsub.f32 0.0, %v162
      %v165 = vsub.f32 0.0, %v163
      %v166 = vmul.f32 %v164, 1.442695
      %v167 = vpow.pop %v166
      %v168 = vmul.f32 %v165, 1.442695
      %v169 = vpow.pop %v168
      %v170 = vadd.f32 %v167, 1.0
      %v171 = vadd.f32 %v169, 1.0
      %v172 = vlog2.pop %v170
      %v173 = vmul.f32 %v172, 0.6931472
      %v174 = vlog2.pop %v171
      %v175 = vmul.f32 %v174, 0.6931472
      %v176 = vadd.f32 %v160, %v173
      %v177 = vadd.f32 %v161, %v175
      %vm178 = vcmp.eq.f32.partialorder %v154, 0.0
      %vm179 = vcmp.eq.f32.partialorder %v155, 0.0
      %vm180 = vcmp.eq.f32.partialorder %v154, 1.0
      %vm181 = vcmp.eq.f32.partialorder %v155, 1.0
      %vm182 = vcmp.ne.f32.partialorder %v154, 255.0
      %vm183 = vcmp.ne.f32.partialorder %v155, 255.0
      %v184 = vlaneseq
      %v185 = vshrl.u32 %v184, 7
      %v186 = vadd.s32 %v185, 8
      %v187 = vmul.u32 %v185, 128
      %v188 = vmul.u32 %v186, 128
      %v189 = vlaneseq
      %v190 = vand.u32 %v189, 127
      %v191 = vadd.s32 %v187, %v190
      %v192 = vadd.s32 %v188, %v190
      %v193 = vstv %s72
      %vm194 = vcmp.lt.s32.totalorder %v191, %v193
      %vm195 = vcmp.lt.s32.totalorder %v192, %v193
      %vm196 = vmand %vm178, %vm194
      %vm197 = vmand %vm179, %vm195
      %vm198 = vmand %vm180, %vm194
      %vm199 = vmand %vm181, %vm195
      %vm200 = vmand %vm182, %vm194
      %vm201 = vmand %vm183, %vm195
      %v202 = vsel %vm196, 1, 0
      %v203 = vsel %vm197, 1, 0
      %v204 = vcvt.s32.f32 %v202
      %v205 = vcvt.s32.f32 %v203
      %v206 = vsel %vm198, 1, 0
      %v207 = vsel %vm199, 1, 0
      %v208 = vcvt.s32.f32 %v206
      %v209 = vcvt.s32.f32 %v207
      %v210 = vsel %vm196, %v176, 0.0
      %v211 = vsel %vm197, %v177, 0.0
      %v212 = vsel %vm198, %v176, 0.0
      %v213 = vsel %vm199, %v177, 0.0
      %v214 = vsel %vm200, %v176, 0.0
      %v215 = vsel %vm201, %v177, 0.0
      %v216 = vadd.f32 %v204, %v205
      %v217 = vadd.f32 %v208, %v209
      %v218 = vadd.f32 %v210, %v211
      %v219 = vadd.f32 %v212, %v213
      %v220 = vadd.f32 %v214, %v215
      %v221 = vadd.f32 %v216, 0.0
      %v222 = vadd.f32 %v217, 0.0
      %v223 = vadd.f32 %v218, 0.0
      %v224 = vadd.f32 %v219, 0.0
      %v225 = vadd.f32 %v220, 0.0
      %v226 = vld [vmem:[#allocation7] sm:$0xff]
      %v227 = vadd.f32 %v226, %v221
      %228 = vst [vmem:[#allocation7] sm:$0xff] %v227
      %v229 = vld [vmem:[#allocation7 + $0x8] sm:$0xff]
      %v230 = vadd.f32 %v229, %v222
      %231 = vst [vmem:[#allocation7 + $0x8] sm:$0xff] %v230
      %v232 = vld [vmem:[#allocation7 + $0x18] sm:$0xff]
      %v233 = vadd.f32 %v232, %v223
      %234 = vst [vmem:[#allocation7 + $0x18] sm:$0xff] %v233
      %v235 = vld [vmem:[#allocation7 + $0x20] sm:$0xff]
      %v236 = vadd.f32 %v235, %v224
      %237 = vst [vmem:[#allocation7 + $0x20] sm:$0xff] %v236
      %v238 = vld [vmem:[#allocation7 + $0x28] sm:$0xff]
      %v239 = vadd.f32 %v238, %v225
      %240 = vst [vmem:[#allocation7 + $0x28] sm:$0xff] %v239
    $region29: #{tpu_custom_call.1} parent=1 // pred_fallthru
      _
    // Predicated region
    $region30: #{tpu_custom_call.1} parent=1 // pred_check
      _
    $region31: #{tpu_custom_call.1} parent=1 // pred_check_branch
      %242 = sbr.rel (0) target = $region33
    $region32: #{tpu_custom_call.1} parent=1 // pred_region
      %s244 = ssub.s32 768, 768
      %245 = vsyncadd [#allocation4], %s244
      %s246 = sshll.u32 [#allocation7], 4
      %s247 = int_to_ptr.vmem [resolvable:$true] %s246
      %252 = dma.vmem_to_hbm [thread:$0]  %s247, 768, %s2, [#allocation4], 128, 128, 8
    $region33: #{tpu_custom_call.1} parent=1 // pred_fallthru
      _
    // Predicated region
    $region34: #{tpu_custom_call.1} parent=1 // pred_check
      _
    $region35: #{tpu_custom_call.1} parent=1 // pred_check_branch
      %254 = sbr.rel (0) target = $region37
    $region36: #{tpu_custom_call.1} parent=1 // pred_region
      %255 = dma.done [#allocation4], 768
    $region37: #{tpu_custom_call.1} parent=1 // pred_fallthru
      _
    %256 = vsyncpa [#allocation3], 1
    %257 = vsyncpa [#allocation6], 1
    %258 = vsyncpa [#allocation4], 1

</llo_original>
